<compile_context>
chip_gen: v6e
topology: v6e:2x2x1
jax: 0.10.0
libtpu: 0.0.40
codegen_flags: <defaults>
</compile_context>

<pallas_src>
import jax
import jax.numpy as jnp
from jax.experimental import pallas as pl
from jax.experimental.pallas import tpu as pltpu

LEAK = 0.2  # LeakyReLU negative slope


# ----------------------------- fused Pallas kernel -------------------------- #

def _fused_block_kernel(xs_ref, w1_ref, wsc_ref, w2_ref, b_ref, g_ref,
                        out_ref, h1p_ref):
    """One batch element per grid step.

    xs_ref   : (1, Ho+1, Wo+1, 4*Cin) f32   space-to-depth padded input
    w1_ref   : (16*Cin, Cout)        bf16   conv1 (4x4,s2) as 2x2/s1 GEMM weight
    wsc_ref  : (16*Cin, Cout)        bf16   shortcut (1x1 conv + avgpool) folded
    w2_ref   : (9*Cout, Cout)        bf16   conv2 (3x3,s1) GEMM weight
    b_ref    : (1, Cout)             f32    shortcut bias
    g_ref    : (1, 1)                f32    gamma (SMEM)
    out_ref  : (1, Ho*Wo, Cout)      f32
    h1p_ref  : (Ho+2, Wo+2, Cout)    f32    VMEM scratch (zero-padded h1)
    """
    _, hp, wp, c4 = xs_ref.shape
    ho, wo = hp - 1, wp - 1
    cout = out_ref.shape[-1]
    m2 = ho * wo

    # ---- conv1 + shortcut share the same 2x2/stride-1 patches of xs --------
    cols = []
    for di in range(2):
        for dj in range(2):
            cols.append(xs_ref[0, pl.ds(di, ho), pl.ds(dj, wo), :].reshape(m2, c4))
    a1 = jnp.concatenate(cols, axis=-1).astype(jnp.bfloat16)        # (M2, 16*Cin)

    # conv1 (4x4, s2, p1) + LeakyReLU(0.2) -- f32 accumulate, f32 epilogue
    h1 = jnp.dot(a1, w1_ref[...], preferred_element_type=jnp.float32)
    h1 = jnp.where(h1 >= 0.0, h1, LEAK * h1)                        # (M2, Cout)

    # shortcut: (1x1 conv + bias) then avg_pool2d(2), folded into one GEMM
    sc = jnp.dot(a1, wsc_ref[...], preferred_element_type=jnp.float32)
    sc = sc + b_ref[...]                                            # (M2, Cout)

    # ---- conv2 (3x3, s1, p1) on h1 via zero-padded VMEM scratch -------------
    # Only the 1-pixel border needs zeroing; the interior is overwritten below.
    zrow = jnp.zeros((1, wp + 1, cout), jnp.float32)
    zcol = jnp.zeros((hp + 1, 1, cout), jnp.float32)
    h1p_ref[0:1, :, :] = zrow
    h1p_ref[ho + 1:ho + 2, :, :] = zrow
    h1p_ref[:, 0:1, :] = zcol
    h1p_ref[:, wo + 1:wo + 2, :] = zcol
    h1p_ref[pl.ds(1, ho), pl.ds(1, wo), :] = h1.reshape(ho, wo, cout)

    cols2 = []
    for di in range(3):
        for dj in range(3):
            cols2.append(h1p_ref[pl.ds(di, ho), pl.ds(dj, wo), :].reshape(m2, cout))
    a2 = jnp.concatenate(cols2, axis=-1).astype(jnp.bfloat16)       # (M2, 9*Cout)

    r = jnp.dot(a2, w2_ref[...], preferred_element_type=jnp.float32)
    r = jnp.where(r >= 0.0, r, LEAK * r)                            # resid (M2, Cout)

    out_ref[0, :, :] = sc + g_ref[0, 0] * r


# ------------------------------- JAX wrapper -------------------------------- #

def init_params(key, in_ch, out_ch):
    k1, k2, k3, k4 = jax.random.split(key, 4)
    w1 = 0.1 * jax.random.normal(k1, (out_ch, in_ch, 4, 4), jnp.float32)   # OIHW, no bias
    w2 = 0.1 * jax.random.normal(k2, (out_ch, out_ch, 3, 3), jnp.float32)  # OIHW, no bias
    if in_ch != out_ch:
        ws = 0.1 * jax.random.normal(k3, (out_ch, in_ch, 1, 1), jnp.float32)
        bs = 0.1 * jax.random.normal(k4, (out_ch,), jnp.float32)
    else:
        # scale_conv is None in the module -> identity 1x1 conv, zero bias
        ws = jnp.eye(out_ch, dtype=jnp.float32)[:, :, None, None]
        bs = jnp.zeros((out_ch,), jnp.float32)
    gamma = jnp.zeros((1,), jnp.float32)   # matches nn.Parameter(torch.zeros(1))
    return dict(w1=w1, w2=w2, ws=ws, bs=bs, gamma=gamma)


def residual_block_d(params, x_nchw):
    """Forward of ResidualBlockD: shortcut(x) + gamma * residual_conv(x)."""
    n, cin, h, w = x_nchw.shape
    assert h % 2 == 0 and w % 2 == 0, "even spatial dims expected"
    cout = params["w1"].shape[0]
    ho, wo = h // 2, w // 2
    m2 = ho * wo
    k1 = 16 * cin       # 4*4*Cin  == 2*2*(4*Cin)
    k2 = 9 * cout       # 3*3*Cout

    # ---- cheap glue: NHWC, pad by 1, space-to-depth (no data expansion) -----
    x = jnp.transpose(x_nchw, (0, 2, 3, 1))                         # NHWC
    xp = jnp.pad(x, ((0, 0), (1, 1), (1, 1), (0, 0)))               # (N, H+2, W+2, Cin)
    phases = [xp[:, a::2, b::2, :] for a in (0, 1) for b in (0, 1)]  # phase idx = a*2+b
    xs = jnp.concatenate(phases, axis=-1)                           # (N, Ho+1, Wo+1, 4*Cin)

    # conv1 weight: OIHW(4,4) -> (di,dj,a,b,ci,co) -> (16*Cin, Cout), bf16.
    # kernel offset kh = 2*di + a, kw = 2*dj + b (di,dj = 2x2 window; a,b = phase)
    w1t = params["w1"].transpose(2, 3, 1, 0)                        # (kh, kw, ci, co)
    w1m = (w1t.reshape(2, 2, 2, 2, cin, cout)                       # (di, a, dj, b, ci, co)
              .transpose(0, 2, 1, 3, 4, 5)                          # (di, dj, a, b, ci, co)
              .reshape(k1, cout).astype(jnp.bfloat16))

    # shortcut: 1x1 conv + avg_pool2d(2) == 2x2/stride-2 window over the
    # UNpadded input, i.e. padded offsets kh,kw in {1,2}:  (di,a) in {(0,1),(1,0)}
    msk = jnp.array([[0.0, 1.0], [1.0, 0.0]], jnp.float32)          # msk[d, phase]
    w11 = params["ws"][:, :, 0, 0].T                                # (Cin, Cout)
    wsm = (0.25 * msk[:, None, :, None, None, None]                 # (di,dj,a,b,ci,co)
                 * msk[None, :, None, :, None, None]
                 * w11[None, None, None, None, :, :]
           ).reshape(k1, cout).astype(jnp.bfloat16)

    # conv2 weight: OIHW(3,3) -> (kh, kw, ci, co) -> (9*Cout, Cout), bf16
    w2m = params["w2"].transpose(2, 3, 1, 0).reshape(k2, cout).astype(jnp.bfloat16)

    bias = params["bs"].reshape(1, cout).astype(jnp.float32)
    gamma = params["gamma"].reshape(1, 1).astype(jnp.float32)

    flops = 2 * n * m2 * cout * (2 * k1 + k2)
    bytes_accessed = (xs.size * 4                                   # input (f32)
                      + (w1m.size + wsm.size + w2m.size) * 2        # weights (bf16)
                      + bias.size * 4
                      + n * m2 * cout * 4)                          # out (f32)

    out2 = pl.pallas_call(
        _fused_block_kernel,
        out_shape=jax.ShapeDtypeStruct((n, m2, cout), jnp.float32),
        grid=(n,),
        in_specs=[
            pl.BlockSpec((1, ho + 1, wo + 1, 4 * cin), lambda i: (i, 0, 0, 0)),
            pl.BlockSpec((k1, cout), lambda i: (0, 0)),   # constant index_map:
            pl.BlockSpec((k1, cout), lambda i: (0, 0)),   # weights fetched once
            pl.BlockSpec((k2, cout), lambda i: (0, 0)),
            pl.BlockSpec((1, cout), lambda i: (0, 0)),
            pl.BlockSpec(memory_space=pltpu.MemorySpace.SMEM),      # gamma scalar
        ],
        out_specs=pl.BlockSpec((1, m2, cout), lambda i: (i, 0, 0)),
        scratch_shapes=[pltpu.VMEM((ho + 2, wo + 2, cout), jnp.float32)],
        compiler_params=pltpu.CompilerParams(
            dimension_semantics=("parallel",),            # megacore over batch
            vmem_limit_bytes=32 * 1024 * 1024),           # fits v5e/v6e/v7x
        cost_estimate=pl.CostEstimate(flops=flops, transcendentals=0,
                                      bytes_accessed=bytes_accessed),
    )(xs, w1m, wsm, w2m, bias, gamma)

    return out2.reshape(n, ho, wo, cout).transpose(0, 3, 1, 2)      # NCHW


# ---------------------------- plain-JAX reference --------------------------- #

def reference(params, x_nchw):
    def conv(x, w, stride, pad):
        return jax.lax.conv_general_dilated(
            x, w, (stride, stride), ((pad, pad), (pad, pad)),
            dimension_numbers=("NCHW", "OIHW", "NCHW"),
            precision=jax.lax.Precision.HIGHEST)

    def lrelu(v):
        return jnp.where(v >= 0, v, LEAK * v)

    h = lrelu(conv(x_nchw, params["w1"], 2, 1))
    h = lrelu(conv(h, params["w2"], 1, 1))
    sc = conv(x_nchw, params["ws"], 1, 0) + params["bs"][None, :, None, None]
    n, c, hh, ww = sc.shape
    sc = sc.reshape(n, c, hh // 2, 2, ww // 2, 2).mean(axis=(3, 5))
    return sc + params["gamma"][0] * h


# ----------------------------------- main ----------------------------------- #

if __name__ == "__main__":
    key = jax.random.PRNGKey(0)
    kx, kp = jax.random.split(key)

    batch, in_ch, out_ch, hw = 2, 4, 8, 16
    x = jax.random.normal(kx, (batch, in_ch, hw, hw), jnp.float32)   # NCHW
    params = init_params(kp, in_ch, out_ch)
    # module inits gamma to 0; use a non-zero value to exercise the combine path
    params["gamma"] = jnp.array([0.5], jnp.float32)

    fwd = jax.jit(residual_block_d)
    out = jax.block_until_ready(fwd(params, x))

    ref_out = reference(params, x)
    assert out.shape == (batch, out_ch, hw // 2, hw // 2)
    # bf16 MXU feed with f32 accumulation -> ~1% relative error vs f32 reference
    assert jnp.allclose(out, ref_out, atol=5e-2, rtol=5e-2), "out mismatch"

    print("KERNEL_OK")
</pallas_src>

<mosaic_0001>
module attributes {stable_mosaic.version = 11 : i64} {
  func.func @_fused_block_kernel(%arg0: i32, %arg1: memref<1x9x9x16xf32, #tpu.memory_space<vmem>>, %arg2: memref<64x8xbf16, #tpu.memory_space<vmem>>, %arg3: memref<64x8xbf16, #tpu.memory_space<vmem>>, %arg4: memref<72x8xbf16, #tpu.memory_space<vmem>>, %arg5: memref<1x8xf32, #tpu.memory_space<vmem>>, %arg6: memref<1x1xf32, #tpu.memory_space<smem>>, %arg7: memref<1x64x8xf32, #tpu.memory_space<vmem>>, %arg8: memref<10x10x8xf32, #tpu.memory_space<vmem>>) attributes {dimension_semantics = [#tpu.dimension_semantics<parallel>], iteration_bounds = array<i64: 2>, scalar_prefetch = 0 : i64, scratch_operands = 1 : i64, tpu.core_type = #tpu.core_type<tc>, window_params = [{transform_indices = @transform_0, window_bounds = array<i64: 1, 9, 9, 16>}, {pipeline_mode = #tpu.pipeline_mode<synchronous>, transform_indices = @transform_1, window_bounds = array<i64: 64, 8>}, {pipeline_mode = #tpu.pipeline_mode<synchronous>, transform_indices = @transform_2, window_bounds = array<i64: 64, 8>}, {pipeline_mode = #tpu.pipeline_mode<synchronous>, transform_indices = @transform_3, window_bounds = array<i64: 72, 8>}, {pipeline_mode = #tpu.pipeline_mode<synchronous>, transform_indices = @transform_4, window_bounds = array<i64: 1, 8>}, {transform_indices = @transform_5, window_bounds = array<i64: 1, 1>}, {transform_indices = @transform_6, window_bounds = array<i64: 1, 64, 8>}]} {
    %c0 = arith.constant 0 : index
    %c0_0 = arith.constant 0 : index
    %c0_1 = arith.constant 0 : index
    %c0_2 = arith.constant 0 : index
    %0 = vector.load %arg1[%c0, %c0_0, %c0_1, %c0_2] : memref<1x9x9x16xf32, #tpu.memory_space<vmem>>, vector<1x8x8x16xf32>
    %1 = vector.shape_cast %0 : vector<1x8x8x16xf32> to vector<8x8x16xf32>
    %2 = vector.shape_cast %1 : vector<8x8x16xf32> to vector<64x16xf32>
    %c0_3 = arith.constant 0 : index
    %c0_4 = arith.constant 0 : index
    %c1 = arith.constant 1 : index
    %c0_5 = arith.constant 0 : index
    %3 = vector.load %arg1[%c0_3, %c0_4, %c1, %c0_5] : memref<1x9x9x16xf32, #tpu.memory_space<vmem>>, vector<1x8x8x16xf32>
    %4 = vector.shape_cast %3 : vector<1x8x8x16xf32> to vector<8x8x16xf32>
    %5 = vector.shape_cast %4 : vector<8x8x16xf32> to vector<64x16xf32>
    %c0_6 = arith.constant 0 : index
    %c1_7 = arith.constant 1 : index
    %c0_8 = arith.constant 0 : index
    %c0_9 = arith.constant 0 : index
    %6 = vector.load %arg1[%c0_6, %c1_7, %c0_8, %c0_9] : memref<1x9x9x16xf32, #tpu.memory_space<vmem>>, vector<1x8x8x16xf32>
    %7 = vector.shape_cast %6 : vector<1x8x8x16xf32> to vector<8x8x16xf32>
    %8 = vector.shape_cast %7 : vector<8x8x16xf32> to vector<64x16xf32>
    %c0_10 = arith.constant 0 : index
    %c1_11 = arith.constant 1 : index
    %c1_12 = arith.constant 1 : index
    %c0_13 = arith.constant 0 : index
    %9 = vector.load %arg1[%c0_10, %c1_11, %c1_12, %c0_13] : memref<1x9x9x16xf32, #tpu.memory_space<vmem>>, vector<1x8x8x16xf32>
    %10 = vector.shape_cast %9 : vector<1x8x8x16xf32> to vector<8x8x16xf32>
    %11 = vector.shape_cast %10 : vector<8x8x16xf32> to vector<64x16xf32>
    %12 = tpu.concatenate %2, %5, %8, %11 in 1 : vector<64x16xf32>, vector<64x16xf32>, vector<64x16xf32>, vector<64x16xf32> -> vector<64x64xf32>
    %13 = arith.truncf %12 : vector<64x64xf32> to vector<64x64xbf16>
    %c0_14 = arith.constant 0 : index
    %c0_15 = arith.constant 0 : index
    %14 = vector.load %arg2[%c0_14, %c0_15] : memref<64x8xbf16, #tpu.memory_space<vmem>>, vector<64x8xbf16>
    %cst = arith.constant dense<0.000000e+00> : vector<64x8xf32>
    %15 = tpu.matmul %13, %14, %cst {dimension_numbers = #tpu.dot_dimension_numbers<[1], [0], [0], [1], [0, 0, 1, 1], [], []>} : vector<64x64xbf16>, vector<64x8xbf16>, vector<64x8xf32> -> vector<64x8xf32>
    %cst_16 = arith.constant 0.000000e+00 : f32
    %16 = vector.broadcast %cst_16 : f32 to vector<64x8xf32>
    %17 = arith.cmpf oge, %15, %16 : vector<64x8xf32>
    %cst_17 = arith.constant 2.000000e-01 : f32
    %18 = vector.broadcast %cst_17 : f32 to vector<64x8xf32>
    %19 = arith.mulf %18, %15 : vector<64x8xf32>
    %20 = arith.select %17, %15, %19 : vector<64x8xi1>, vector<64x8xf32>
    %c0_18 = arith.constant 0 : index
    %c0_19 = arith.constant 0 : index
    %21 = vector.load %arg3[%c0_18, %c0_19] : memref<64x8xbf16, #tpu.memory_space<vmem>>, vector<64x8xbf16>
    %cst_20 = arith.constant dense<0.000000e+00> : vector<64x8xf32>
    %22 = tpu.matmul %13, %21, %cst_20 {dimension_numbers = #tpu.dot_dimension_numbers<[1], [0], [0], [1], [0, 0, 1, 1], [], []>} : vector<64x64xbf16>, vector<64x8xbf16>, vector<64x8xf32> -> vector<64x8xf32>
    %c0_21 = arith.constant 0 : index
    %c0_22 = arith.constant 0 : index
    %23 = vector.load %arg5[%c0_21, %c0_22] : memref<1x8xf32, #tpu.memory_space<vmem>>, vector<1x8xf32>
    %24 = vector.broadcast %23 : vector<1x8xf32> to vector<64x8xf32>
    %25 = arith.addf %22, %24 : vector<64x8xf32>
    %cst_23 = arith.constant 0.000000e+00 : f32
    %26 = vector.broadcast %cst_23 : f32 to vector<1x10x8xf32>
    %cst_24 = arith.constant 0.000000e+00 : f32
    %27 = vector.broadcast %cst_24 : f32 to vector<10x1x8xf32>
    %c0_25 = arith.constant 0 : index
    %c0_26 = arith.constant 0 : index
    %c0_27 = arith.constant 0 : index
    %28 = vector.load %arg8[%c0_25, %c0_26, %c0_27] : memref<10x10x8xf32, #tpu.memory_space<vmem>>, vector<1x10x8xf32>
    tpu.vector_store %arg8[%c0_25, %c0_26, %c0_27], %26 {strides = array<i32>} : memref<10x10x8xf32, #tpu.memory_space<vmem>>, vector<1x10x8xf32>,
    %c9 = arith.constant 9 : index
    %c0_28 = arith.constant 0 : index
    %c0_29 = arith.constant 0 : index
    %29 = vector.load %arg8[%c9, %c0_28, %c0_29] : memref<10x10x8xf32, #tpu.memory_space<vmem>>, vector<1x10x8xf32>
    tpu.vector_store %arg8[%c9, %c0_28, %c0_29], %26 {strides = array<i32>} : memref<10x10x8xf32, #tpu.memory_space<vmem>>, vector<1x10x8xf32>,
    %c0_30 = arith.constant 0 : index
    %c0_31 = arith.constant 0 : index
    %c0_32 = arith.constant 0 : index
    %30 = vector.load %arg8[%c0_30, %c0_31, %c0_32] : memref<10x10x8xf32, #tpu.memory_space<vmem>>, vector<10x1x8xf32>
    tpu.vector_store %arg8[%c0_30, %c0_31, %c0_32], %27 {strides = array<i32>} : memref<10x10x8xf32, #tpu.memory_space<vmem>>, vector<10x1x8xf32>,
    %c0_33 = arith.constant 0 : index
    %c9_34 = arith.constant 9 : index
    %c0_35 = arith.constant 0 : index
    %31 = vector.load %arg8[%c0_33, %c9_34, %c0_35] : memref<10x10x8xf32, #tpu.memory_space<vmem>>, vector<10x1x8xf32>
    tpu.vector_store %arg8[%c0_33, %c9_34, %c0_35], %27 {strides = array<i32>} : memref<10x10x8xf32, #tpu.memory_space<vmem>>, vector<10x1x8xf32>,
    %32 = vector.shape_cast %20 : vector<64x8xf32> to vector<8x8x8xf32>
    %c1_36 = arith.constant 1 : index
    %c1_37 = arith.constant 1 : index
    %c0_38 = arith.constant 0 : index
    %33 = vector.load %arg8[%c1_36, %c1_37, %c0_38] : memref<10x10x8xf32, #tpu.memory_space<vmem>>, vector<8x8x8xf32>
    tpu.vector_store %arg8[%c1_36, %c1_37, %c0_38], %32 {strides = array<i32>} : memref<10x10x8xf32, #tpu.memory_space<vmem>>, vector<8x8x8xf32>,
    %c0_39 = arith.constant 0 : index
    %c0_40 = arith.constant 0 : index
    %c0_41 = arith.constant 0 : index
    %34 = vector.load %arg8[%c0_39, %c0_40, %c0_41] : memref<10x10x8xf32, #tpu.memory_space<vmem>>, vector<8x8x8xf32>
    %35 = vector.shape_cast %34 : vector<8x8x8xf32> to vector<64x8xf32>
    %c0_42 = arith.constant 0 : index
    %c1_43 = arith.constant 1 : index
    %c0_44 = arith.constant 0 : index
    %36 = vector.load %arg8[%c0_42, %c1_43, %c0_44] : memref<10x10x8xf32, #tpu.memory_space<vmem>>, vector<8x8x8xf32>
    %37 = vector.shape_cast %36 : vector<8x8x8xf32> to vector<64x8xf32>
    %c0_45 = arith.constant 0 : index
    %c2 = arith.constant 2 : index
    %c0_46 = arith.constant 0 : index
    %38 = vector.load %arg8[%c0_45, %c2, %c0_46] : memref<10x10x8xf32, #tpu.memory_space<vmem>>, vector<8x8x8xf32>
    %39 = vector.shape_cast %38 : vector<8x8x8xf32> to vector<64x8xf32>
    %c1_47 = arith.constant 1 : index
    %c0_48 = arith.constant 0 : index
    %c0_49 = arith.constant 0 : index
    %40 = vector.load %arg8[%c1_47, %c0_48, %c0_49] : memref<10x10x8xf32, #tpu.memory_space<vmem>>, vector<8x8x8xf32>
    %41 = vector.shape_cast %40 : vector<8x8x8xf32> to vector<64x8xf32>
    %c1_50 = arith.constant 1 : index
    %c1_51 = arith.constant 1 : index
    %c0_52 = arith.constant 0 : index
    %42 = vector.load %arg8[%c1_50, %c1_51, %c0_52] : memref<10x10x8xf32, #tpu.memory_space<vmem>>, vector<8x8x8xf32>
    %43 = vector.shape_cast %42 : vector<8x8x8xf32> to vector<64x8xf32>
    %c1_53 = arith.constant 1 : index
    %c2_54 = arith.constant 2 : index
    %c0_55 = arith.constant 0 : index
    %44 = vector.load %arg8[%c1_53, %c2_54, %c0_55] : memref<10x10x8xf32, #tpu.memory_space<vmem>>, vector<8x8x8xf32>
    %45 = vector.shape_cast %44 : vector<8x8x8xf32> to vector<64x8xf32>
    %c2_56 = arith.constant 2 : index
    %c0_57 = arith.constant 0 : index
    %c0_58 = arith.constant 0 : index
    %46 = vector.load %arg8[%c2_56, %c0_57, %c0_58] : memref<10x10x8xf32, #tpu.memory_space<vmem>>, vector<8x8x8xf32>
    %47 = vector.shape_cast %46 : vector<8x8x8xf32> to vector<64x8xf32>
    %c2_59 = arith.constant 2 : index
    %c1_60 = arith.constant 1 : index
    %c0_61 = arith.constant 0 : index
    %48 = vector.load %arg8[%c2_59, %c1_60, %c0_61] : memref<10x10x8xf32, #tpu.memory_space<vmem>>, vector<8x8x8xf32>
    %49 = vector.shape_cast %48 : vector<8x8x8xf32> to vector<64x8xf32>
    %c2_62 = arith.constant 2 : index
    %c2_63 = arith.constant 2 : index
    %c0_64 = arith.constant 0 : index
    %50 = vector.load %arg8[%c2_62, %c2_63, %c0_64] : memref<10x10x8xf32, #tpu.memory_space<vmem>>, vector<8x8x8xf32>
    %51 = vector.shape_cast %50 : vector<8x8x8xf32> to vector<64x8xf32>
    %52 = tpu.concatenate %35, %37, %39, %41, %43, %45, %47, %49, %51 in 1 : vector<64x8xf32>, vector<64x8xf32>, vector<64x8xf32>, vector<64x8xf32>, vector<64x8xf32>, vector<64x8xf32>, vector<64x8xf32>, vector<64x8xf32>, vector<64x8xf32> -> vector<64x72xf32>
    %53 = arith.truncf %52 : vector<64x72xf32> to vector<64x72xbf16>
    %c0_65 = arith.constant 0 : index
    %c0_66 = arith.constant 0 : index
    %54 = vector.load %arg4[%c0_65, %c0_66] : memref<72x8xbf16, #tpu.memory_space<vmem>>, vector<72x8xbf16>
    %cst_67 = arith.constant dense<0.000000e+00> : vector<64x8xf32>
    %55 = tpu.matmul %53, %54, %cst_67 {dimension_numbers = #tpu.dot_dimension_numbers<[1], [0], [0], [1], [0, 0, 1, 1], [], []>} : vector<64x72xbf16>, vector<72x8xbf16>, vector<64x8xf32> -> vector<64x8xf32>
    %cst_68 = arith.constant 0.000000e+00 : f32
    %56 = vector.broadcast %cst_68 : f32 to vector<64x8xf32>
    %57 = arith.cmpf oge, %55, %56 : vector<64x8xf32>
    %cst_69 = arith.constant 2.000000e-01 : f32
    %58 = vector.broadcast %cst_69 : f32 to vector<64x8xf32>
    %59 = arith.mulf %58, %55 : vector<64x8xf32>
    %60 = arith.select %57, %55, %59 : vector<64x8xi1>, vector<64x8xf32>
    %c0_70 = arith.constant 0 : index
    %c0_71 = arith.constant 0 : index
    %61 = memref.load %arg6[%c0_70, %c0_71] : memref<1x1xf32, #tpu.memory_space<smem>>
    %62 = vector.broadcast %61 : f32 to vector<64x8xf32>
    %63 = arith.mulf %62, %60 : vector<64x8xf32>
    %64 = arith.addf %25, %63 : vector<64x8xf32>
    %c0_72 = arith.constant 0 : index
    %c0_73 = arith.constant 0 : index
    %c0_74 = arith.constant 0 : index
    %65 = vector.load %arg7[%c0_72, %c0_73, %c0_74] : memref<1x64x8xf32, #tpu.memory_space<vmem>>, vector<1x64x8xf32>
    %66 = vector.shape_cast %65 : vector<1x64x8xf32> to vector<64x8xf32>
    %67 = vector.shape_cast %64 : vector<64x8xf32> to vector<1x64x8xf32>
    tpu.vector_store %arg7[%c0_72, %c0_73, %c0_74], %67 {strides = array<i32>} : memref<1x64x8xf32, #tpu.memory_space<vmem>>, vector<1x64x8xf32>,
    return
  }
  func.func @transform_0(%arg0: i32) -> (i32, i32, i32, i32) {
    %c0_i32 = arith.constant 0 : i32
    %c0_i32_0 = arith.constant 0 : i32
    %c0_i32_1 = arith.constant 0 : i32
    %c0_i32_2 = arith.constant 0 : i32
    return %arg0, %c0_i32, %c0_i32_0, %c0_i32_1 : i32, i32, i32, i32
  }
  func.func @transform_1(%arg0: i32) -> (i32, i32) {
    %c0_i32 = arith.constant 0 : i32
    %c0_i32_0 = arith.constant 0 : i32
    %c0_i32_1 = arith.constant 0 : i32
    return %c0_i32, %c0_i32_0 : i32, i32
  }
  func.func @transform_2(%arg0: i32) -> (i32, i32) {
    %c0_i32 = arith.constant 0 : i32
    %c0_i32_0 = arith.constant 0 : i32
    %c0_i32_1 = arith.constant 0 : i32
    return %c0_i32, %c0_i32_0 : i32, i32
  }
  func.func @transform_3(%arg0: i32) -> (i32, i32) {
    %c0_i32 = arith.constant 0 : i32
    %c0_i32_0 = arith.constant 0 : i32
    %c0_i32_1 = arith.constant 0 : i32
    return %c0_i32, %c0_i32_0 : i32, i32
  }
  func.func @transform_4(%arg0: i32) -> (i32, i32) {
    %c0_i32 = arith.constant 0 : i32
    %c0_i32_0 = arith.constant 0 : i32
    %c0_i32_1 = arith.constant 0 : i32
    return %c0_i32, %c0_i32_0 : i32, i32
  }
  func.func @transform_5(%arg0: i32) -> (i32, i32) {
    %c0_i32 = arith.constant 0 : i32
    %c0_i32_0 = arith.constant 0 : i32
    %c0_i32_1 = arith.constant 0 : i32
    return %c0_i32, %c0_i32_0 : i32, i32
  }
  func.func @transform_6(%arg0: i32) -> (i32, i32, i32) {
    %c0_i32 = arith.constant 0 : i32
    %c0_i32_0 = arith.constant 0 : i32
    %c0_i32_1 = arith.constant 0 : i32
    return %arg0, %c0_i32, %c0_i32_0 : i32, i32, i32
  }
}

</mosaic_0001>

<llo_original>
// kernel: residual_block_d.1
$region0: #{residual_block_d.1}
  #allocation0 [shape = 'u32[]', space=smem, size = 0x4, offset = 0x4, fixed_abs, tag = 'smem constant byte address 0x4 - core index']
  #allocation1 [shape = 'u32[144,128]{1,0:T(1,128)}', space=vmem, size = 0x12000, scoped, tag = 'internal scratch']
  #allocation2 [shape = 'f32[10,10,8]{2,1,0:T(8,128)}', space=vmem, size = 0x14000, scoped, tag = 'scratch operand']
  #allocation3 [shape = 'f32[1,1]{1,0:T(1,128)S(6)}', space=smem, size = 0x200, scoped, tag = 'scoped memory for residual_block_d.1']
  %s0 = inlined_call_operand.vmem [shape: f32[2,9,9,16], index: 0, kind: input, shape index: {}]
  %s1 = inlined_call_operand.vmem [shape: bf16[64,8], index: 1, kind: input, shape index: {}]
  %s2 = inlined_call_operand.vmem [shape: bf16[64,8], index: 2, kind: input, shape index: {}]
  %s3 = inlined_call_operand.vmem [shape: bf16[72,8], index: 3, kind: input, shape index: {}]
  %s4 = inlined_call_operand.vmem [shape: f32[1,8], index: 4, kind: input, shape index: {}]
  %s5 = inlined_call_operand.<no memory space> [shape: f32[1,1], index: 5, kind: input, shape index: {}]
  %s6 = inlined_call_operand.vmem [shape: f32[2,64,8], index: 6, kind: output, shape index: {}]
  %s7 = sld [smem:[#allocation0]]
  $region57: #{residual_block_d.1} parent=0
    _
  %s9 = ssub.s32 1, %s7
  %s10 = scalar_select 0, %s9, %s7
  %11 = sst [smem:[#allocation3]] %s5
  loop: start=0, step=1, limit=4
  $region2: #{residual_block_d.1} parent=0 // loop_pre_header
    _
  $region3: #{residual_block_d.1} parent=0 // loop_header
    %s13 = sphi 0, %s17
    %p14 = scmp.ge.s32.totalorder %s13, 4
    %s23 = sphi 0, %s25
    %s26 = sphi 0, %s23
    %s27 = sphi 0, %s26
    %s43 = sphi 0, %s27
    %s47 = sphi 0, %s47
    %s49 = sphi 0, %s47
    %s50 = sphi 0, %s49
    %s64 = sphi 0, %s50
    %s68 = sphi 0, %s68
    %s70 = sphi 0, %s68
    %s71 = sphi 0, %s70
    %s85 = sphi 0, %s71
    %s89 = sphi 0, %s89
    %s91 = sphi 0, %s89
    %s92 = sphi 0, %s91
    %s106 = sphi 0, %s92
    %s110 = sphi 0, %s110
    %s112 = sphi 0, %s110
    %s113 = sphi 0, %s112
    %s127 = sphi 0, %s113
    %s131 = sphi 0, %s131
    %s133 = sphi 0, %s131
    %s134 = sphi 0, %s133
    %s148 = sphi 0, %s134
    %s154 = sphi 0, %s156
    %s157 = sphi 0, %s154
    %s158 = sphi 0, %s157
    %s174 = sphi 0, %s158
  $region4: #{residual_block_d.1} parent=0 // loop_header_branch
    %16 = sbr.rel (%p14) target = $region8
  $region5: #{residual_block_d.1} parent=0 // loop_body
    %s18 = ssub.s32 %s13, 1
    %s19 = ssub.s32 %s13, 2
    %s20 = sadd.s32 %s13, 1
    %s21 = ssub.s32 %s13, %s20
    %p22 = scmp.eq.s32.totalorder %s21, 0
    %s24 = sadd.s32 %s23, 1
    %s25 = scalar_select %p22, %s23, %s24
    %p28 = pneg %p22
    %p29 = scmp.eq.s32.totalorder %s13, 1
    %p30 = por %p28, %p29
    %p31 = scmp.ne.s32.totalorder %s23, %s26
    %p32 = scmp.eq.s32.totalorder %s13, 0
    %p33 = por %p31, %p32
    %p34 = scmp.ne.s32.totalorder %s23, %s26
    %p35 = scmp.eq.s32.totalorder %s18, 1
    %p36 = por %p34, %p35
    %p37 = scmp.ne.s32.totalorder %s26, %s27
    %p38 = scmp.eq.s32.totalorder %s18, 0
    %p39 = por %p37, %p38
    %p40 = scmp.ne.s32.totalorder %s26, %s27
    %p41 = scmp.eq.s32.totalorder %s19, 1
    %p42 = por %p40, %p41
    %p44 = scmp.ne.s32.totalorder %s27, %s43
    %p45 = scmp.eq.s32.totalorder %s19, 0
    %p46 = por %p44, %p45
    %s48 = sadd.s32 %s47, 1
    %p51 = scmp.eq.s32.totalorder %s13, 1
    %p52 = scmp.ne.s32.totalorder %s47, %s49
    %p53 = scmp.eq.s32.totalorder %s13, 0
    %p54 = por %p52, %p53
    %p55 = scmp.ne.s32.totalorder %s47, %s49
    %p56 = scmp.eq.s32.totalorder %s18, 1
    %p57 = por %p55, %p56
    %p58 = scmp.ne.s32.totalorder %s49, %s50
    %p59 = scmp.eq.s32.totalorder %s18, 0
    %p60 = por %p58, %p59
    %p61 = scmp.ne.s32.totalorder %s49, %s50
    %p62 = scmp.eq.s32.totalorder %s19, 1
    %p63 = por %p61, %p62
    %p65 = scmp.ne.s32.totalorder %s50, %s64
    %p66 = scmp.eq.s32.totalorder %s19, 0
    %p67 = por %p65, %p66
    %s69 = sadd.s32 %s68, 1
    %p72 = scmp.eq.s32.totalorder %s13, 1
    %p73 = scmp.ne.s32.totalorder %s68, %s70
    %p74 = scmp.eq.s32.totalorder %s13, 0
    %p75 = por %p73, %p74
    %p76 = scmp.ne.s32.totalorder %s68, %s70
    %p77 = scmp.eq.s32.totalorder %s18, 1
    %p78 = por %p76, %p77
    %p79 = scmp.ne.s32.totalorder %s70, %s71
    %p80 = scmp.eq.s32.totalorder %s18, 0
    %p81 = por %p79, %p80
    %p82 = scmp.ne.s32.totalorder %s70, %s71
    %p83 = scmp.eq.s32.totalorder %s19, 1
    %p84 = por %p82, %p83
    %p86 = scmp.ne.s32.totalorder %s71, %s85
    %p87 = scmp.eq.s32.totalorder %s19, 0
    %p88 = por %p86, %p87
    %s90 = sadd.s32 %s89, 1
    %p93 = scmp.eq.s32.totalorder %s13, 1
    %p94 = scmp.ne.s32.totalorder %s89, %s91
    %p95 = scmp.eq.s32.totalorder %s13, 0
    %p96 = por %p94, %p95
    %p97 = scmp.ne.s32.totalorder %s89, %s91
    %p98 = scmp.eq.s32.totalorder %s18, 1
    %p99 = por %p97, %p98
    %p100 = scmp.ne.s32.totalorder %s91, %s92
    %p101 = scmp.eq.s32.totalorder %s18, 0
    %p102 = por %p100, %p101
    %p103 = scmp.ne.s32.totalorder %s91, %s92
    %p104 = scmp.eq.s32.totalorder %s19, 1
    %p105 = por %p103, %p104
    %p107 = scmp.ne.s32.totalorder %s92, %s106
    %p108 = scmp.eq.s32.totalorder %s19, 0
    %p109 = por %p107, %p108
    %s111 = sadd.s32 %s110, 1
    %p114 = scmp.eq.s32.totalorder %s13, 1
    %p115 = scmp.ne.s32.totalorder %s110, %s112
    %p116 = scmp.eq.s32.totalorder %s13, 0
    %p117 = por %p115, %p116
    %p118 = scmp.ne.s32.totalorder %s110, %s112
    %p119 = scmp.eq.s32.totalorder %s18, 1
    %p120 = por %p118, %p119
    %p121 = scmp.ne.s32.totalorder %s112, %s113
    %p122 = scmp.eq.s32.totalorder %s18, 0
    %p123 = por %p121, %p122
    %p124 = scmp.ne.s32.totalorder %s112, %s113
    %p125 = scmp.eq.s32.totalorder %s19, 1
    %p126 = por %p124, %p125
    %p128 = scmp.ne.s32.totalorder %s113, %s127
    %p129 = scmp.eq.s32.totalorder %s19, 0
    %p130 = por %p128, %p129
    %s132 = sadd.s32 %s131, 1
    %p135 = scmp.eq.s32.totalorder %s13, 1
    %p136 = scmp.ne.s32.totalorder %s131, %s133
    %p137 = scmp.eq.s32.totalorder %s13, 0
    %p138 = por %p136, %p137
    %p139 = scmp.ne.s32.totalorder %s131, %s133
    %p140 = scmp.eq.s32.totalorder %s18, 1
    %p141 = por %p139, %p140
    %p142 = scmp.ne.s32.totalorder %s133, %s134
    %p143 = scmp.eq.s32.totalorder %s18, 0
    %p144 = por %p142, %p143
    %p145 = scmp.ne.s32.totalorder %s133, %s134
    %p146 = scmp.eq.s32.totalorder %s19, 1
    %p147 = por %p145, %p146
    %p149 = scmp.ne.s32.totalorder %s134, %s148
    %p150 = scmp.eq.s32.totalorder %s19, 0
    %p151 = por %p149, %p150
    %s152 = ssub.s32 %s13, %s20
    %p153 = scmp.eq.s32.totalorder %s152, 0
    %s155 = sadd.s32 %s154, 1
    %s156 = scalar_select %p153, %s154, %s155
    %p159 = pneg %p153
    %p160 = scmp.eq.s32.totalorder %s13, 1
    %p161 = por %p159, %p160
    %p162 = scmp.ne.s32.totalorder %s154, %s157
    %p163 = scmp.eq.s32.totalorder %s13, 0
    %p164 = por %p162, %p163
    %p165 = scmp.ne.s32.totalorder %s154, %s157
    %p166 = scmp.eq.s32.totalorder %s18, 1
    %p167 = por %p165, %p166
    %p168 = scmp.ne.s32.totalorder %s157, %s158
    %p169 = scmp.eq.s32.totalorder %s18, 0
    %p170 = por %p168, %p169
    %p171 = scmp.ne.s32.totalorder %s157, %s158
    %p172 = scmp.eq.s32.totalorder %s19, 1
    %p173 = por %p171, %p172
    %p175 = scmp.ne.s32.totalorder %s158, %s174
    %p176 = scmp.eq.s32.totalorder %s19, 0
    %p177 = por %p175, %p176
    %p178 = scmp.le.s32.totalorder 1, %s13
    %p179 = scmp.lt.s32.totalorder %s13, 3
    %p180 = pnand %p178, %p179
    %p181 = pneg %p180
    // Predicated region
    $region9: #{residual_block_d.1} parent=5 // pred_check
      _
    $region10: #{residual_block_d.1} parent=5 // pred_check_branch
      %183 = sbr.rel (%p180) target = $region12
    $region11: #{residual_block_d.1} parent=5 // pred_region
      %s184 = ssub.s32 %s13, 1
      // Predicated region
      $region13: #{residual_block_d.1} parent=11 // pred_check
        %p185 = pneg %p60
      $region14: #{residual_block_d.1} parent=11 // pred_check_branch
        %187 = sbr.rel (%p185) target = $region16
      $region15: #{residual_block_d.1} parent=11 // pred_region
        _
      $region16: #{residual_block_d.1} parent=11 // pred_fallthru
        _
      // Predicated region
      $region17: #{residual_block_d.1} parent=11 // pred_check
        %p188 = pneg %p81
      $region18: #{residual_block_d.1} parent=11 // pred_check_branch
        %190 = sbr.rel (%p188) target = $region20
      $region19: #{residual_block_d.1} parent=11 // pred_region
        _
      $region20: #{residual_block_d.1} parent=11 // pred_fallthru
        _
      // Predicated region
      $region21: #{residual_block_d.1} parent=11 // pred_check
        %p191 = pneg %p102
      $region22: #{residual_block_d.1} parent=11 // pred_check_branch
        %193 = sbr.rel (%p191) target = $region24
      $region23: #{residual_block_d.1} parent=11 // pred_region
        _
      $region24: #{residual_block_d.1} parent=11 // pred_fallthru
        _
      // Predicated region
      $region25: #{residual_block_d.1} parent=11 // pred_check
        %p194 = pneg %p123
      $region26: #{residual_block_d.1} parent=11 // pred_check_branch
        %196 = sbr.rel (%p194) target = $region28
      $region27: #{residual_block_d.1} parent=11 // pred_region
        _
      $region28: #{residual_block_d.1} parent=11 // pred_fallthru
        _
      // Predicated region
      $region29: #{residual_block_d.1} parent=11 // pred_check
        %p197 = pneg %p144
      $region30: #{residual_block_d.1} parent=11 // pred_check_branch
        %199 = sbr.rel (%p197) target = $region32
      $region31: #{residual_block_d.1} parent=11 // pred_region
        _
      $region32: #{residual_block_d.1} parent=11 // pred_fallthru
        _
    $region12: #{residual_block_d.1} parent=5 // pred_fallthru
      _
    %p200 = scmp.lt.s32.totalorder %s13, 2
    // Predicated region
    $region33: #{residual_block_d.1} parent=5 // pred_check
      %p201 = pneg %p200
    $region34: #{residual_block_d.1} parent=5 // pred_check_branch
      %203 = sbr.rel (%p201) target = $region36
    $region35: #{residual_block_d.1} parent=5 // pred_region
      // Predicated region
      $region37: #{residual_block_d.1} parent=35 // pred_check
        %p204 = pneg %p33
      $region38: #{residual_block_d.1} parent=35 // pred_check_branch
        %206 = sbr.rel (%p204) target = $region40
      $region39: #{residual_block_d.1} parent=35 // pred_region
        %p207 = scmp.lt.s32.totalorder %s13, 1
        %s208 = scalar_select %p207, %s13, 1
        %s209 = smul.addr %s208, 18
        %s210 = smul.addr %s209, 8
        %s211 = scalar_lea.vmem %s0, %s210
      $region40: #{residual_block_d.1} parent=35 // pred_fallthru
        _
    $region36: #{residual_block_d.1} parent=5 // pred_fallthru
      _
    %p212 = scmp.le.s32.totalorder 1, %s13
    %p213 = scmp.lt.s32.totalorder %s13, 3
    %p214 = pnand %p212, %p213
    %p215 = pneg %p214
    // Predicated region
    $region41: #{residual_block_d.1} parent=5 // pred_check
      _
    $region42: #{residual_block_d.1} parent=5 // pred_check_branch
      %217 = sbr.rel (%p214) target = $region44
    $region43: #{residual_block_d.1} parent=5 // pred_region
      %s218 = ssub.s32 %s13, 1
      %p219 = scmp.lt.s32.totalorder %s18, 1
      %s220 = scalar_select %p219, %s18, 1
      %s221 = smul.addr %s220, 18
      %s222 = smul.addr %s221, 8
      %s223 = scalar_lea.vmem %s0, %s222
      %p224 = pneg %p39
      %p225 = pneg %p36
      %p226 = pneg %p60
      %p227 = pneg %p57
      %p228 = pneg %p81
      %p229 = pneg %p78
      %p230 = pneg %p102
      %p231 = pneg %p99
      %p232 = pneg %p123
      %p233 = pneg %p120
      %p234 = pneg %p144
      %p235 = pneg %p141
      %p236 = pneg %p170
      %p237 = pneg %p167
      %p238 = scmp.lt.s32.totalorder %s18, 1
      %s239 = scalar_select %p238, %s18, 1
      %s240 = smul.addr %s239, 8
      %s241 = smul.addr %s240, 8
      %s242 = scalar_lea.vmem %s6, %s241
      %p243 = scmp.lt.s32.totalorder %s18, 1
      %s244 = scalar_select %p243, %s18, 1
      %s245 = smul.addr %s244, 18
      %s246 = smul.addr %s245, 8
      %s247 = scalar_lea.vmem %s0, %s246
      %p248 = scmp.lt.s32.totalorder %s18, 1
      %s249 = scalar_select %p248, %s18, 1
      %s250 = smul.addr %s249, 8
      %s251 = smul.addr %s250, 8
      %s252 = scalar_lea.vmem %s6, %s251
      %v254 = vld [vmem:[%s247] sm:$0xff]
      %v255 = vld [vmem:[%s247 + $0x10] sm:$0xff]
      %v256 = vld [vmem:[%s247 + $0x20] sm:$0xff]
      %v257 = vld [vmem:[%s247 + $0x30] sm:$0xff]
      %v258 = vld [vmem:[%s247 + $0x40] sm:$0xff]
      %v259 = vld [vmem:[%s247 + $0x50] sm:$0xff]
      %v260 = vld [vmem:[%s247 + $0x60] sm:$0xff]
      %v261 = vld [vmem:[%s247 + $0x70] sm:$0xff]
      %v262 = vld [vmem:[%s247 + $0x1] sm:$0xff]
      %v263 = vld [vmem:[%s247 + $0x11] sm:$0xff]
      %v264 = vld [vmem:[%s247 + $0x21] sm:$0xff]
      %v265 = vld [vmem:[%s247 + $0x31] sm:$0xff]
      %v266 = vld [vmem:[%s247 + $0x41] sm:$0xff]
      %v267 = vld [vmem:[%s247 + $0x51] sm:$0xff]
      %v268 = vld [vmem:[%s247 + $0x61] sm:$0xff]
      %v269 = vld [vmem:[%s247 + $0x71] sm:$0xff]
      %s270 = scalar_lea.vmem %s247, 16
      %v271 = vld [vmem:[%s270] sm:$0xff]
      %v272 = vld [vmem:[%s270 + $0x10] sm:$0xff]
      %v273 = vld [vmem:[%s270 + $0x20] sm:$0xff]
      %v274 = vld [vmem:[%s270 + $0x30] sm:$0xff]
      %v275 = vld [vmem:[%s270 + $0x40] sm:$0xff]
      %v276 = vld [vmem:[%s270 + $0x50] sm:$0xff]
      %v277 = vld [vmem:[%s270 + $0x60] sm:$0xff]
      %v278 = vld [vmem:[%s270 + $0x70] sm:$0xff]
      %v279 = vld [vmem:[%s270 + $0x1] sm:$0xff]
      %v280 = vld [vmem:[%s270 + $0x11] sm:$0xff]
      %v281 = vld [vmem:[%s270 + $0x21] sm:$0xff]
      %v282 = vld [vmem:[%s270 + $0x31] sm:$0xff]
      %v283 = vld [vmem:[%s270 + $0x41] sm:$0xff]
      %v284 = vld [vmem:[%s270 + $0x51] sm:$0xff]
      %v285 = vld [vmem:[%s270 + $0x61] sm:$0xff]
      %v286 = vld [vmem:[%s270 + $0x71] sm:$0xff]
      %295 = vrot.lane.b32.xlu0 %v262, 16
      %v296 = vpop.permute.xlu0 %295
      %297 = vrot.lane.b32.xlu0 %v263, 16
      %v298 = vpop.permute.xlu0 %297
      %299 = vrot.lane.b32.xlu0 %v264, 16
      %v300 = vpop.permute.xlu0 %299
      %301 = vrot.lane.b32.xlu0 %v265, 16
      %v302 = vpop.permute.xlu0 %301
      %303 = vrot.lane.b32.xlu0 %v266, 16
      %v304 = vpop.permute.xlu0 %303
      %305 = vrot.lane.b32.xlu0 %v267, 16
      %v306 = vpop.permute.xlu0 %305
      %307 = vrot.lane.b32.xlu0 %v268, 16
      %v308 = vpop.permute.xlu0 %307
      %309 = vrot.lane.b32.xlu0 %v269, 16
      %v310 = vpop.permute.xlu0 %309
      %327 = vrot.lane.b32.xlu0 %v271, 32
      %v328 = vpop.permute.xlu0 %327
      %329 = vrot.lane.b32.xlu0 %v272, 32
      %v330 = vpop.permute.xlu0 %329
      %331 = vrot.lane.b32.xlu0 %v273, 32
      %v332 = vpop.permute.xlu0 %331
      %333 = vrot.lane.b32.xlu0 %v274, 32
      %v334 = vpop.permute.xlu0 %333
      %335 = vrot.lane.b32.xlu0 %v275, 32
      %v336 = vpop.permute.xlu0 %335
      %337 = vrot.lane.b32.xlu0 %v276, 32
      %v338 = vpop.permute.xlu0 %337
      %339 = vrot.lane.b32.xlu0 %v277, 32
      %v340 = vpop.permute.xlu0 %339
      %341 = vrot.lane.b32.xlu0 %v278, 32
      %v342 = vpop.permute.xlu0 %341
      %359 = vrot.lane.b32.xlu0 %v279, 48
      %v360 = vpop.permute.xlu0 %359
      %361 = vrot.lane.b32.xlu0 %v280, 48
      %v362 = vpop.permute.xlu0 %361
      %363 = vrot.lane.b32.xlu0 %v281, 48
      %v364 = vpop.permute.xlu0 %363
      %365 = vrot.lane.b32.xlu0 %v282, 48
      %v366 = vpop.permute.xlu0 %365
      %367 = vrot.lane.b32.xlu0 %v283, 48
      %v368 = vpop.permute.xlu0 %367
      %369 = vrot.lane.b32.xlu0 %v284, 48
      %v370 = vpop.permute.xlu0 %369
      %371 = vrot.lane.b32.xlu0 %v285, 48
      %v372 = vpop.permute.xlu0 %371
      %373 = vrot.lane.b32.xlu0 %v286, 48
      %v374 = vpop.permute.xlu0 %373
      %vm383 = vcmask 130048
      %v384 = vsel %vm383, %v254, %v296
      %v385 = vsel %vm383, %v255, %v298
      %v386 = vsel %vm383, %v256, %v300
      %v387 = vsel %vm383, %v257, %v302
      %v388 = vsel %vm383, %v258, %v304
      %v389 = vsel %vm383, %v259, %v306
      %v390 = vsel %vm383, %v260, %v308
      %v391 = vsel %vm383, %v261, %v310
      %vm392 = vcmask 261120
      %v393 = vsel %vm392, %v384, %v328
      %v394 = vsel %vm392, %v385, %v330
      %v395 = vsel %vm392, %v386, %v332
      %v396 = vsel %vm392, %v387, %v334
      %v397 = vsel %vm392, %v388, %v336
      %v398 = vsel %vm392, %v389, %v338
      %v399 = vsel %vm392, %v390, %v340
      %v400 = vsel %vm392, %v391, %v342
      %vm401 = vcmask 392192
      %v402 = vsel %vm401, %v393, %v360
      %v403 = vsel %vm401, %v394, %v362
      %v404 = vsel %vm401, %v395, %v364
      %v405 = vsel %vm401, %v396, %v366
      %v406 = vsel %vm401, %v397, %v368
      %v407 = vsel %vm401, %v398, %v370
      %v408 = vsel %vm401, %v399, %v372
      %v409 = vsel %vm401, %v400, %v374
      %v410 = vpack.c.bf16 %v403, %v402
      %v411 = vpack.c.bf16 %v405, %v404
      %v412 = vpack.c.bf16 %v407, %v406
      %v413 = vpack.c.bf16 %v409, %v408
      %v414 = vld [vmem:[%s1] sm:$0xf]
      %v415 = vld [vmem:[%s1 + $0x4] sm:$0xf]
      %v416 = vld [vmem:[%s1 + $0x8] sm:$0xf]
      %v417 = vld [vmem:[%s1 + $0xc] sm:$0xf]
      %v418 = vld [vmem:[%s1 + $0x10] sm:$0xf]
      %v419 = vld [vmem:[%s1 + $0x14] sm:$0xf]
      %v420 = vld [vmem:[%s1 + $0x18] sm:$0xf]
      %v421 = vld [vmem:[%s1 + $0x1c] sm:$0xf]
      %v430 = vunpack.c.l.b16 %v414
      %v431 = vunpack.c.l.b16 %v415
      %v432 = vunpack.c.l.b16 %v416
      %v433 = vunpack.c.l.b16 %v417
      %v434 = vunpack.c.l.b16 %v418
      %v435 = vunpack.c.l.b16 %v419
      %v436 = vunpack.c.l.b16 %v420
      %v437 = vunpack.c.l.b16 %v421
      %v438 = vpack.c.b16 %v431, %v430
      %v439 = vpack.c.b16 %v433, %v432
      %v440 = vpack.c.b16 %v435, %v434
      %v441 = vpack.c.b16 %v437, %v436
      %vm446 = vcmask 523264
      %v448 = vsel %vm446, %v410, 0
      %v451 = vsel %vm446, %v411, 0
      %v454 = vsel %vm446, %v412, 0
      %v457 = vsel %vm446, %v413, 0
      %459 = vmatprep.subr.bf16.mxu0 0
      %460 = vmatpush1.bf16.msra.mxu0 0
      %461 = vmatprep.subr.bf16.mxu0 0
      %462 = vmatpush1.bf16.msra.mxu0 0
      %463 = vmatprep.subr.bf16.mxu0 0
      %464 = vmatpush1.bf16.msra.mxu0 0
      %465 = vmatprep.subr.bf16.mxu0 0
      %466 = vmatpush1.bf16.msra.mxu0 0
      %467 = vmatprep.subr.bf16.mxu0 0
      %468 = vmatpush1.bf16.msra.mxu0 %v441
      %469 = vmatprep.subr.bf16.mxu0 0
      %470 = vmatpush1.bf16.msra.mxu0 %v440
      %471 = vmatprep.subr.bf16.mxu0 0
      %472 = vmatpush1.bf16.msra.mxu0 %v439
      %473 = vmatprep.subr.bf16.mxu0 0
      %474 = vmatpush1.bf16.msra.mxu0 %v438
      %475 = vmatprep.subr.bf16.mxu0 0
      %476 = vmatpush2.bf16.msra.mxu0 0
      %477 = vmatprep.subr.bf16.mxu0 0
      %478 = vmatpush2.bf16.msra.mxu0 0
      %479 = vmatprep.subr.bf16.mxu0 0
      %480 = vmatpush2.bf16.msra.mxu0 0
      %481 = vmatprep.subr.bf16.mxu0 0
      %482 = vmatpush2.bf16.msra.mxu0 0
      %483 = vmatprep.subr.bf16.mxu0 0
      %484 = vmatpush2.bf16.msra.mxu0 0
      %485 = vmatprep.subr.bf16.mxu0 0
      %486 = vmatpush2.bf16.msra.mxu0 0
      %487 = vmatprep.subr.bf16.mxu0 0
      %488 = vmatpush2.bf16.msra.mxu0 0
      %489 = vmatprep.subr.bf16.mxu0 0
      %490 = vmatpush2.bf16.msra.mxu0 0
      %491 = vmatprep.mubr.bf16.mxu0 0
      %492 = vmatmul.mubr.bf16.gmra.mxu0 %v448
      %v493 = vpop.f32.mrf.mxu0
      %v494 = vadd.f32 0.0, %v493
      %v495 = vpop.f32.mrf.mxu0
      %v496 = vpop.f32.mrf.mxu0
      %v497 = vadd.f32 0.0, %v496
      %v498 = vpop.f32.mrf.mxu0
      %499 = vmatprep.mubr.bf16.mxu0 0
      %500 = vmatmul.mubr.bf16.gmra.mxu0 %v451
      %v501 = vpop.f32.mrf.mxu0
      %v502 = vadd.f32 0.0, %v501
      %v503 = vpop.f32.mrf.mxu0
      %v504 = vpop.f32.mrf.mxu0
      %v505 = vadd.f32 0.0, %v504
      %v506 = vpop.f32.mrf.mxu0
      %507 = vmatprep.mubr.bf16.mxu0 0
      %508 = vmatmul.mubr.bf16.gmra.mxu0 %v454
      %v509 = vpop.f32.mrf.mxu0
      %v510 = vadd.f32 0.0, %v509
      %v511 = vpop.f32.mrf.mxu0
      %v512 = vpop.f32.mrf.mxu0
      %v513 = vadd.f32 0.0, %v512
      %v514 = vpop.f32.mrf.mxu0
      %515 = vmatprep.mubr.bf16.mxu0 0
      %516 = vmatmul.mubr.bf16.gmra.mxu0 %v457
      %v517 = vpop.f32.mrf.mxu0
      %v518 = vadd.f32 0.0, %v517
      %v519 = vpop.f32.mrf.mxu0
      %v520 = vpop.f32.mrf.mxu0
      %v521 = vadd.f32 0.0, %v520
      %v522 = vpop.f32.mrf.mxu0
      %523 = vdwg.mxu0
      %vm524 = vcmp.ge.f32.partialorder %v494, 0.0
      %vm525 = vcmp.ge.f32.partialorder %v497, 0.0
      %vm526 = vcmp.ge.f32.partialorder %v502, 0.0
      %vm527 = vcmp.ge.f32.partialorder %v505, 0.0
      %vm528 = vcmp.ge.f32.partialorder %v510, 0.0
      %vm529 = vcmp.ge.f32.partialorder %v513, 0.0
      %vm530 = vcmp.ge.f32.partialorder %v518, 0.0
      %vm531 = vcmp.ge.f32.partialorder %v521, 0.0
      %v532 = vmul.f32 %v494, 0.2
      %v533 = vmul.f32 %v497, 0.2
      %v534 = vmul.f32 %v502, 0.2
      %v535 = vmul.f32 %v505, 0.2
      %v536 = vmul.f32 %v510, 0.2
      %v537 = vmul.f32 %v513, 0.2
      %v538 = vmul.f32 %v518, 0.2
      %v539 = vmul.f32 %v521, 0.2
      %v540 = vsel %vm524, %v494, %v532
      %v541 = vsel %vm525, %v497, %v533
      %v542 = vsel %vm526, %v502, %v534
      %v543 = vsel %vm527, %v505, %v535
      %v544 = vsel %vm528, %v510, %v536
      %v545 = vsel %vm529, %v513, %v537
      %v546 = vsel %vm530, %v518, %v538
      %v547 = vsel %vm531, %v521, %v539
      %v548 = vld [vmem:[%s2] sm:$0xf]
      %v549 = vld [vmem:[%s2 + $0x4] sm:$0xf]
      %v550 = vld [vmem:[%s2 + $0x8] sm:$0xf]
      %v551 = vld [vmem:[%s2 + $0xc] sm:$0xf]
      %v552 = vld [vmem:[%s2 + $0x10] sm:$0xf]
      %v553 = vld [vmem:[%s2 + $0x14] sm:$0xf]
      %v554 = vld [vmem:[%s2 + $0x18] sm:$0xf]
      %v555 = vld [vmem:[%s2 + $0x1c] sm:$0xf]
      %v556 = vld [vmem:[%s4] sm:$0x1]
      %v558 = vlaneseq
      %v559 = vshrl.u32 %v558, 7
      %v560 = vsub.s32 0, %v559
      %v561 = vrot.slane %v556, %v560
      %v571 = vunpack.c.l.b16 %v548
      %v572 = vunpack.c.l.b16 %v549
      %v573 = vunpack.c.l.b16 %v550
      %v574 = vunpack.c.l.b16 %v551
      %v575 = vunpack.c.l.b16 %v552
      %v576 = vunpack.c.l.b16 %v553
      %v577 = vunpack.c.l.b16 %v554
      %v578 = vunpack.c.l.b16 %v555
      %v579 = vpack.c.b16 %v572, %v571
      %v580 = vpack.c.b16 %v574, %v573
      %v581 = vpack.c.b16 %v576, %v575
      %v582 = vpack.c.b16 %v578, %v577
      %587 = vmatprep.subr.bf16.mxu0 0
      %588 = vmatpush1.bf16.msra.mxu0 0
      %589 = vmatprep.subr.bf16.mxu0 0
      %590 = vmatpush1.bf16.msra.mxu0 0
      %591 = vmatprep.subr.bf16.mxu0 0
      %592 = vmatpush1.bf16.msra.mxu0 0
      %593 = vmatprep.subr.bf16.mxu0 0
      %594 = vmatpush1.bf16.msra.mxu0 0
      %595 = vmatprep.subr.bf16.mxu0 0
      %596 = vmatpush1.bf16.msra.mxu0 %v582
      %597 = vmatprep.subr.bf16.mxu0 0
      %598 = vmatpush1.bf16.msra.mxu0 %v581
      %599 = vmatprep.subr.bf16.mxu0 0
      %600 = vmatpush1.bf16.msra.mxu0 %v580
      %601 = vmatprep.subr.bf16.mxu0 0
      %602 = vmatpush1.bf16.msra.mxu0 %v579
      %603 = vmatprep.subr.bf16.mxu0 0
      %604 = vmatpush2.bf16.msra.mxu0 0
      %605 = vmatprep.subr.bf16.mxu0 0
      %606 = vmatpush2.bf16.msra.mxu0 0
      %607 = vmatprep.subr.bf16.mxu0 0
      %608 = vmatpush2.bf16.msra.mxu0 0
      %609 = vmatprep.subr.bf16.mxu0 0
      %610 = vmatpush2.bf16.msra.mxu0 0
      %611 = vmatprep.subr.bf16.mxu0 0
      %612 = vmatpush2.bf16.msra.mxu0 0
      %613 = vmatprep.subr.bf16.mxu0 0
      %614 = vmatpush2.bf16.msra.mxu0 0
      %615 = vmatprep.subr.bf16.mxu0 0
      %616 = vmatpush2.bf16.msra.mxu0 0
      %617 = vmatprep.subr.bf16.mxu0 0
      %618 = vmatpush2.bf16.msra.mxu0 0
      %619 = vmatprep.mubr.bf16.mxu0 0
      %620 = vmatmul.mubr.bf16.gmra.mxu0 %v448
      %v621 = vpop.f32.mrf.mxu0
      %v622 = vadd.f32 %v561, %v621
      %v623 = vpop.f32.mrf.mxu0
      %v624 = vpop.f32.mrf.mxu0
      %v625 = vadd.f32 %v561, %v624
      %v626 = vpop.f32.mrf.mxu0
      %627 = vmatprep.mubr.bf16.mxu0 0
      %628 = vmatmul.mubr.bf16.gmra.mxu0 %v451
      %v629 = vpop.f32.mrf.mxu0
      %v630 = vadd.f32 %v561, %v629
      %v631 = vpop.f32.mrf.mxu0
      %v632 = vpop.f32.mrf.mxu0
      %v633 = vadd.f32 %v561, %v632
      %v634 = vpop.f32.mrf.mxu0
      %635 = vmatprep.mubr.bf16.mxu0 0
      %636 = vmatmul.mubr.bf16.gmra.mxu0 %v454
      %v637 = vpop.f32.mrf.mxu0
      %v638 = vadd.f32 %v561, %v637
      %v639 = vpop.f32.mrf.mxu0
      %v640 = vpop.f32.mrf.mxu0
      %v641 = vadd.f32 %v561, %v640
      %v642 = vpop.f32.mrf.mxu0
      %643 = vmatprep.mubr.bf16.mxu0 0
      %644 = vmatmul.mubr.bf16.gmra.mxu0 %v457
      %v645 = vpop.f32.mrf.mxu0
      %v646 = vadd.f32 %v561, %v645
      %v647 = vpop.f32.mrf.mxu0
      %v648 = vpop.f32.mrf.mxu0
      %v649 = vadd.f32 %v561, %v648
      %v650 = vpop.f32.mrf.mxu0
      %651 = vdwg.mxu0
      %vm652 = vcmask 64512
      %653 = vst.msk [vmem:[#allocation2] sm:$0xff] %vm652, 0.0
      %vm654 = vcmask 58368
      %655 = vst.msk [vmem:[#allocation2 + $0x8] sm:$0x3] %vm654, 0.0
      %s656 = scalar_lea.vmem [#allocation2], 144
      %657 = vst.msk [vmem:[%s656] sm:$0xff] %vm652, 0.0
      %658 = vst.msk [vmem:[%s656 + $0x8] sm:$0x3] %vm654, 0.0
      %vm659 = vcmask 57344
      %660 = vst.msk [vmem:[#allocation2] sm:$0x1] %vm659, 0.0
      %661 = vst.msk [vmem:[#allocation2 + $0x10] sm:$0x1] %vm659, 0.0
      %662 = vst.msk [vmem:[#allocation2 + $0x20] sm:$0x1] %vm659, 0.0
      %663 = vst.msk [vmem:[#allocation2 + $0x30] sm:$0x1] %vm659, 0.0
      %664 = vst.msk [vmem:[#allocation2 + $0x40] sm:$0x1] %vm659, 0.0
      %665 = vst.msk [vmem:[#allocation2 + $0x50] sm:$0x1] %vm659, 0.0
      %666 = vst.msk [vmem:[#allocation2 + $0x60] sm:$0x1] %vm659, 0.0
      %667 = vst.msk [vmem:[#allocation2 + $0x70] sm:$0x1] %vm659, 0.0
      %668 = vst.msk [vmem:[#allocation2 + $0x80] sm:$0x1] %vm659, 0.0
      %669 = vst.msk [vmem:[#allocation2 + $0x90] sm:$0x1] %vm659, 0.0
      %670 = vst.msk [vmem:[#allocation2 + $0x9] sm:$0x1] %vm659, 0.0
      %671 = vst.msk [vmem:[#allocation2 + $0x19] sm:$0x1] %vm659, 0.0
      %672 = vst.msk [vmem:[#allocation2 + $0x29] sm:$0x1] %vm659, 0.0
      %673 = vst.msk [vmem:[#allocation2 + $0x39] sm:$0x1] %vm659, 0.0
      %674 = vst.msk [vmem:[#allocation2 + $0x49] sm:$0x1] %vm659, 0.0
      %675 = vst.msk [vmem:[#allocation2 + $0x59] sm:$0x1] %vm659, 0.0
      %676 = vst.msk [vmem:[#allocation2 + $0x69] sm:$0x1] %vm659, 0.0
      %677 = vst.msk [vmem:[#allocation2 + $0x79] sm:$0x1] %vm659, 0.0
      %678 = vst.msk [vmem:[#allocation2 + $0x89] sm:$0x1] %vm659, 0.0
      %679 = vst.msk [vmem:[#allocation2 + $0x99] sm:$0x1] %vm659, 0.0
      %s680 = scalar_lea.vmem [#allocation2], 16
      %681 = vst.msk [vmem:[%s680 + $0x1] sm:$0xff] %vm652, %v540
      %682 = vst.msk [vmem:[%s680 + $0x11] sm:$0xff] %vm652, %v541
      %683 = vst.msk [vmem:[%s680 + $0x21] sm:$0xff] %vm652, %v542
      %684 = vst.msk [vmem:[%s680 + $0x31] sm:$0xff] %vm652, %v543
      %685 = vst.msk [vmem:[%s680 + $0x41] sm:$0xff] %vm652, %v544
      %686 = vst.msk [vmem:[%s680 + $0x51] sm:$0xff] %vm652, %v545
      %687 = vst.msk [vmem:[%s680 + $0x61] sm:$0xff] %vm652, %v546
      %688 = vst.msk [vmem:[%s680 + $0x71] sm:$0xff] %vm652, %v547
      %v689 = vld [vmem:[#allocation2] sm:$0xff]
      %v690 = vld [vmem:[#allocation2 + $0x10] sm:$0xff]
      %v691 = vld [vmem:[#allocation2 + $0x20] sm:$0xff]
      %v692 = vld [vmem:[#allocation2 + $0x30] sm:$0xff]
      %v693 = vld [vmem:[#allocation2 + $0x40] sm:$0xff]
      %v694 = vld [vmem:[#allocation2 + $0x50] sm:$0xff]
      %v695 = vld [vmem:[#allocation2 + $0x60] sm:$0xff]
      %v696 = vld [vmem:[#allocation2 + $0x70] sm:$0xff]
      %v697 = vld [vmem:[#allocation2 + $0x1] sm:$0xff]
      %v698 = vld [vmem:[#allocation2 + $0x11] sm:$0xff]
      %v699 = vld [vmem:[#allocation2 + $0x21] sm:$0xff]
      %v700 = vld [vmem:[#allocation2 + $0x31] sm:$0xff]
      %v701 = vld [vmem:[#allocation2 + $0x41] sm:$0xff]
      %v702 = vld [vmem:[#allocation2 + $0x51] sm:$0xff]
      %v703 = vld [vmem:[#allocation2 + $0x61] sm:$0xff]
      %v704 = vld [vmem:[#allocation2 + $0x71] sm:$0xff]
      %v705 = vld [vmem:[#allocation2 + $0x2] sm:$0xff]
      %v706 = vld [vmem:[#allocation2 + $0x12] sm:$0xff]
      %v707 = vld [vmem:[#allocation2 + $0x22] sm:$0xff]
      %v708 = vld [vmem:[#allocation2 + $0x32] sm:$0xff]
      %v709 = vld [vmem:[#allocation2 + $0x42] sm:$0xff]
      %v710 = vld [vmem:[#allocation2 + $0x52] sm:$0xff]
      %v711 = vld [vmem:[#allocation2 + $0x62] sm:$0xff]
      %v712 = vld [vmem:[#allocation2 + $0x72] sm:$0xff]
      %v713 = vld [vmem:[%s680] sm:$0xff]
      %v714 = vld [vmem:[%s680 + $0x10] sm:$0xff]
      %v715 = vld [vmem:[%s680 + $0x20] sm:$0xff]
      %v716 = vld [vmem:[%s680 + $0x30] sm:$0xff]
      %v717 = vld [vmem:[%s680 + $0x40] sm:$0xff]
      %v718 = vld [vmem:[%s680 + $0x50] sm:$0xff]
      %v719 = vld [vmem:[%s680 + $0x60] sm:$0xff]
      %v720 = vld [vmem:[%s680 + $0x70] sm:$0xff]
      %v721 = vld [vmem:[%s680 + $0x1] sm:$0xff]
      %v722 = vld [vmem:[%s680 + $0x11] sm:$0xff]
      %v723 = vld [vmem:[%s680 + $0x21] sm:$0xff]
      %v724 = vld [vmem:[%s680 + $0x31] sm:$0xff]
      %v725 = vld [vmem:[%s680 + $0x41] sm:$0xff]
      %v726 = vld [vmem:[%s680 + $0x51] sm:$0xff]
      %v727 = vld [vmem:[%s680 + $0x61] sm:$0xff]
      %v728 = vld [vmem:[%s680 + $0x71] sm:$0xff]
      %v729 = vld [vmem:[%s680 + $0x2] sm:$0xff]
      %v730 = vld [vmem:[%s680 + $0x12] sm:$0xff]
      %v731 = vld [vmem:[%s680 + $0x22] sm:$0xff]
      %v732 = vld [vmem:[%s680 + $0x32] sm:$0xff]
      %v733 = vld [vmem:[%s680 + $0x42] sm:$0xff]
      %v734 = vld [vmem:[%s680 + $0x52] sm:$0xff]
      %v735 = vld [vmem:[%s680 + $0x62] sm:$0xff]
      %v736 = vld [vmem:[%s680 + $0x72] sm:$0xff]
      %s737 = scalar_lea.vmem [#allocation2], 32
      %v738 = vld [vmem:[%s737] sm:$0xff]
      %v739 = vld [vmem:[%s737 + $0x10] sm:$0xff]
      %v740 = vld [vmem:[%s737 + $0x20] sm:$0xff]
      %v741 = vld [vmem:[%s737 + $0x30] sm:$0xff]
      %v742 = vld [vmem:[%s737 + $0x40] sm:$0xff]
      %v743 = vld [vmem:[%s737 + $0x50] sm:$0xff]
      %v744 = vld [vmem:[%s737 + $0x60] sm:$0xff]
      %v745 = vld [vmem:[%s737 + $0x70] sm:$0xff]
      %v746 = vld [vmem:[%s737 + $0x1] sm:$0xff]
      %v747 = vld [vmem:[%s737 + $0x11] sm:$0xff]
      %v748 = vld [vmem:[%s737 + $0x21] sm:$0xff]
      %v749 = vld [vmem:[%s737 + $0x31] sm:$0xff]
      %v750 = vld [vmem:[%s737 + $0x41] sm:$0xff]
      %v751 = vld [vmem:[%s737 + $0x51] sm:$0xff]
      %v752 = vld [vmem:[%s737 + $0x61] sm:$0xff]
      %v753 = vld [vmem:[%s737 + $0x71] sm:$0xff]
      %v754 = vld [vmem:[%s737 + $0x2] sm:$0xff]
      %v755 = vld [vmem:[%s737 + $0x12] sm:$0xff]
      %v756 = vld [vmem:[%s737 + $0x22] sm:$0xff]
      %v757 = vld [vmem:[%s737 + $0x32] sm:$0xff]
      %v758 = vld [vmem:[%s737 + $0x42] sm:$0xff]
      %v759 = vld [vmem:[%s737 + $0x52] sm:$0xff]
      %v760 = vld [vmem:[%s737 + $0x62] sm:$0xff]
      %v761 = vld [vmem:[%s737 + $0x72] sm:$0xff]
      %770 = vrot.lane.b32.xlu0 %v697, 8
      %v771 = vpop.permute.xlu0 %770
      %772 = vrot.lane.b32.xlu0 %v698, 8
      %v773 = vpop.permute.xlu0 %772
      %774 = vrot.lane.b32.xlu0 %v699, 8
      %v775 = vpop.permute.xlu0 %774
      %776 = vrot.lane.b32.xlu0 %v700, 8
      %v777 = vpop.permute.xlu0 %776
      %778 = vrot.lane.b32.xlu0 %v701, 8
      %v779 = vpop.permute.xlu0 %778
      %780 = vrot.lane.b32.xlu0 %v702, 8
      %v781 = vpop.permute.xlu0 %780
      %782 = vrot.lane.b32.xlu0 %v703, 8
      %v783 = vpop.permute.xlu0 %782
      %784 = vrot.lane.b32.xlu0 %v704, 8
      %v785 = vpop.permute.xlu0 %784
      %802 = vrot.lane.b32.xlu0 %v705, 16
      %v803 = vpop.permute.xlu0 %802
      %804 = vrot.lane.b32.xlu0 %v706, 16
      %v805 = vpop.permute.xlu0 %804
      %806 = vrot.lane.b32.xlu0 %v707, 16
      %v807 = vpop.permute.xlu0 %806
      %808 = vrot.lane.b32.xlu0 %v708, 16
      %v809 = vpop.permute.xlu0 %808
      %810 = vrot.lane.b32.xlu0 %v709, 16
      %v811 = vpop.permute.xlu0 %810
      %812 = vrot.lane.b32.xlu0 %v710, 16
      %v813 = vpop.permute.xlu0 %812
      %814 = vrot.lane.b32.xlu0 %v711, 16
      %v815 = vpop.permute.xlu0 %814
      %816 = vrot.lane.b32.xlu0 %v712, 16
      %v817 = vpop.permute.xlu0 %816
      %834 = vrot.lane.b32.xlu0 %v713, 24
      %v835 = vpop.permute.xlu0 %834
      %836 = vrot.lane.b32.xlu0 %v714, 24
      %v837 = vpop.permute.xlu0 %836
      %838 = vrot.lane.b32.xlu0 %v715, 24
      %v839 = vpop.permute.xlu0 %838
      %840 = vrot.lane.b32.xlu0 %v716, 24
      %v841 = vpop.permute.xlu0 %840
      %842 = vrot.lane.b32.xlu0 %v717, 24
      %v843 = vpop.permute.xlu0 %842
      %844 = vrot.lane.b32.xlu0 %v718, 24
      %v845 = vpop.permute.xlu0 %844
      %846 = vrot.lane.b32.xlu0 %v719, 24
      %v847 = vpop.permute.xlu0 %846
      %848 = vrot.lane.b32.xlu0 %v720, 24
      %v849 = vpop.permute.xlu0 %848
      %866 = vrot.lane.b32.xlu0 %v721, 32
      %v867 = vpop.permute.xlu0 %866
      %868 = vrot.lane.b32.xlu0 %v722, 32
      %v869 = vpop.permute.xlu0 %868
      %870 = vrot.lane.b32.xlu0 %v723, 32
      %v871 = vpop.permute.xlu0 %870
      %872 = vrot.lane.b32.xlu0 %v724, 32
      %v873 = vpop.permute.xlu0 %872
      %874 = vrot.lane.b32.xlu0 %v725, 32
      %v875 = vpop.permute.xlu0 %874
      %876 = vrot.lane.b32.xlu0 %v726, 32
      %v877 = vpop.permute.xlu0 %876
      %878 = vrot.lane.b32.xlu0 %v727, 32
      %v879 = vpop.permute.xlu0 %878
      %880 = vrot.lane.b32.xlu0 %v728, 32
      %v881 = vpop.permute.xlu0 %880
      %898 = vrot.lane.b32.xlu0 %v729, 40
      %v899 = vpop.permute.xlu0 %898
      %900 = vrot.lane.b32.xlu0 %v730, 40
      %v901 = vpop.permute.xlu0 %900
      %902 = vrot.lane.b32.xlu0 %v731, 40
      %v903 = vpop.permute.xlu0 %902
      %904 = vrot.lane.b32.xlu0 %v732, 40
      %v905 = vpop.permute.xlu0 %904
      %906 = vrot.lane.b32.xlu0 %v733, 40
      %v907 = vpop.permute.xlu0 %906
      %908 = vrot.lane.b32.xlu0 %v734, 40
      %v909 = vpop.permute.xlu0 %908
      %910 = vrot.lane.b32.xlu0 %v735, 40
      %v911 = vpop.permute.xlu0 %910
      %912 = vrot.lane.b32.xlu0 %v736, 40
      %v913 = vpop.permute.xlu0 %912
      %930 = vrot.lane.b32.xlu0 %v738, 48
      %v931 = vpop.permute.xlu0 %930
      %932 = vrot.lane.b32.xlu0 %v739, 48
      %v933 = vpop.permute.xlu0 %932
      %934 = vrot.lane.b32.xlu0 %v740, 48
      %v935 = vpop.permute.xlu0 %934
      %936 = vrot.lane.b32.xlu0 %v741, 48
      %v937 = vpop.permute.xlu0 %936
      %938 = vrot.lane.b32.xlu0 %v742, 48
      %v939 = vpop.permute.xlu0 %938
      %940 = vrot.lane.b32.xlu0 %v743, 48
      %v941 = vpop.permute.xlu0 %940
      %942 = vrot.lane.b32.xlu0 %v744, 48
      %v943 = vpop.permute.xlu0 %942
      %944 = vrot.lane.b32.xlu0 %v745, 48
      %v945 = vpop.permute.xlu0 %944
      %962 = vrot.lane.b32.xlu0 %v746, 56
      %v963 = vpop.permute.xlu0 %962
      %964 = vrot.lane.b32.xlu0 %v747, 56
      %v965 = vpop.permute.xlu0 %964
      %966 = vrot.lane.b32.xlu0 %v748, 56
      %v967 = vpop.permute.xlu0 %966
      %968 = vrot.lane.b32.xlu0 %v749, 56
      %v969 = vpop.permute.xlu0 %968
      %970 = vrot.lane.b32.xlu0 %v750, 56
      %v971 = vpop.permute.xlu0 %970
      %972 = vrot.lane.b32.xlu0 %v751, 56
      %v973 = vpop.permute.xlu0 %972
      %974 = vrot.lane.b32.xlu0 %v752, 56
      %v975 = vpop.permute.xlu0 %974
      %976 = vrot.lane.b32.xlu0 %v753, 56
      %v977 = vpop.permute.xlu0 %976
      %994 = vrot.lane.b32.xlu0 %v754, 64
      %v995 = vpop.permute.xlu0 %994
      %996 = vrot.lane.b32.xlu0 %v755, 64
      %v997 = vpop.permute.xlu0 %996
      %998 = vrot.lane.b32.xlu0 %v756, 64
      %v999 = vpop.permute.xlu0 %998
      %1000 = vrot.lane.b32.xlu0 %v757, 64
      %v1001 = vpop.permute.xlu0 %1000
      %1002 = vrot.lane.b32.xlu0 %v758, 64
      %v1003 = vpop.permute.xlu0 %1002
      %1004 = vrot.lane.b32.xlu0 %v759, 64
      %v1005 = vpop.permute.xlu0 %1004
      %1006 = vrot.lane.b32.xlu0 %v760, 64
      %v1007 = vpop.permute.xlu0 %1006
      %1008 = vrot.lane.b32.xlu0 %v761, 64
      %v1009 = vpop.permute.xlu0 %1008
      %v1018 = vsel %vm652, %v689, %v771
      %v1019 = vsel %vm652, %v690, %v773
      %v1020 = vsel %vm652, %v691, %v775
      %v1021 = vsel %vm652, %v692, %v777
      %v1022 = vsel %vm652, %v693, %v779
      %v1023 = vsel %vm652, %v694, %v781
      %v1024 = vsel %vm652, %v695, %v783
      %v1025 = vsel %vm652, %v696, %v785
      %v1026 = vsel %vm383, %v1018, %v803
      %v1027 = vsel %vm383, %v1019, %v805
      %v1028 = vsel %vm383, %v1020, %v807
      %v1029 = vsel %vm383, %v1021, %v809
      %v1030 = vsel %vm383, %v1022, %v811
      %v1031 = vsel %vm383, %v1023, %v813
      %v1032 = vsel %vm383, %v1024, %v815
      %v1033 = vsel %vm383, %v1025, %v817
      %vm1034 = vcmask 195584
      %v1035 = vsel %vm1034, %v1026, %v835
      %v1036 = vsel %vm1034, %v1027, %v837
      %v1037 = vsel %vm1034, %v1028, %v839
      %v1038 = vsel %vm1034, %v1029, %v841
      %v1039 = vsel %vm1034, %v1030, %v843
      %v1040 = vsel %vm1034, %v1031, %v845
      %v1041 = vsel %vm1034, %v1032, %v847
      %v1042 = vsel %vm1034, %v1033, %v849
      %v1043 = vsel %vm392, %v1035, %v867
      %v1044 = vsel %vm392, %v1036, %v869
      %v1045 = vsel %vm392, %v1037, %v871
      %v1046 = vsel %vm392, %v1038, %v873
      %v1047 = vsel %vm392, %v1039, %v875
      %v1048 = vsel %vm392, %v1040, %v877
      %v1049 = vsel %vm392, %v1041, %v879
      %v1050 = vsel %vm392, %v1042, %v881
      %vm1051 = vcmask 326656
      %v1052 = vsel %vm1051, %v1043, %v899
      %v1053 = vsel %vm1051, %v1044, %v901
      %v1054 = vsel %vm1051, %v1045, %v903
      %v1055 = vsel %vm1051, %v1046, %v905
      %v1056 = vsel %vm1051, %v1047, %v907
      %v1057 = vsel %vm1051, %v1048, %v909
      %v1058 = vsel %vm1051, %v1049, %v911
      %v1059 = vsel %vm1051, %v1050, %v913
      %v1060 = vsel %vm401, %v1052, %v931
      %v1061 = vsel %vm401, %v1053, %v933
      %v1062 = vsel %vm401, %v1054, %v935
      %v1063 = vsel %vm401, %v1055, %v937
      %v1064 = vsel %vm401, %v1056, %v939
      %v1065 = vsel %vm401, %v1057, %v941
      %v1066 = vsel %vm401, %v1058, %v943
      %v1067 = vsel %vm401, %v1059, %v945
      %vm1068 = vcmask 457728
      %v1069 = vsel %vm1068, %v1060, %v963
      %v1070 = vsel %vm1068, %v1061, %v965
      %v1071 = vsel %vm1068, %v1062, %v967
      %v1072 = vsel %vm1068, %v1063, %v969
      %v1073 = vsel %vm1068, %v1064, %v971
      %v1074 = vsel %vm1068, %v1065, %v973
      %v1075 = vsel %vm1068, %v1066, %v975
      %v1076 = vsel %vm1068, %v1067, %v977
      %v1077 = vsel %vm446, %v1069, %v995
      %v1078 = vsel %vm446, %v1070, %v997
      %v1079 = vsel %vm446, %v1071, %v999
      %v1080 = vsel %vm446, %v1072, %v1001
      %v1081 = vsel %vm446, %v1073, %v1003
      %v1082 = vsel %vm446, %v1074, %v1005
      %v1083 = vsel %vm446, %v1075, %v1007
      %v1084 = vsel %vm446, %v1076, %v1009
      %v1085 = vpack.c.bf16 %v1078, %v1077
      %v1086 = vpack.c.bf16 %v1080, %v1079
      %v1087 = vpack.c.bf16 %v1082, %v1081
      %v1088 = vpack.c.bf16 %v1084, %v1083
      %v1089 = vld [vmem:[%s3] sm:$0xf]
      %v1090 = vld [vmem:[%s3 + $0x4] sm:$0xf]
      %v1091 = vld [vmem:[%s3 + $0x8] sm:$0xf]
      %v1092 = vld [vmem:[%s3 + $0xc] sm:$0xf]
      %v1093 = vld [vmem:[%s3 + $0x10] sm:$0xf]
      %v1094 = vld [vmem:[%s3 + $0x14] sm:$0xf]
      %v1095 = vld [vmem:[%s3 + $0x18] sm:$0xf]
      %v1096 = vld [vmem:[%s3 + $0x1c] sm:$0xf]
      %v1097 = vld [vmem:[%s3 + $0x20] sm:$0xf]
      %v1107 = vunpack.c.l.b16 %v1089
      %v1108 = vunpack.c.l.b16 %v1090
      %v1109 = vunpack.c.l.b16 %v1091
      %v1110 = vunpack.c.l.b16 %v1092
      %v1111 = vunpack.c.l.b16 %v1093
      %v1112 = vunpack.c.l.b16 %v1094
      %v1113 = vunpack.c.l.b16 %v1095
      %v1114 = vunpack.c.l.b16 %v1096
      %v1115 = vunpack.c.l.b16 %v1097
      %v1116 = vpack.c.b16 %v1108, %v1107
      %v1117 = vpack.c.b16 %v1110, %v1109
      %v1118 = vpack.c.b16 %v1112, %v1111
      %v1119 = vpack.c.b16 %v1114, %v1113
      %v1120 = vpack.c.b16 %v1115, %v1115
      %vm1125 = vcmask 588800
      %v1127 = vsel %vm1125, %v1085, 0
      %v1130 = vsel %vm1125, %v1086, 0
      %v1133 = vsel %vm1125, %v1087, 0
      %v1136 = vsel %vm1125, %v1088, 0
      %vm1138 = vcmask 1043456
      %v1140 = vsel %vm1138, %v1120, 0
      %1142 = vmatprep.subr.bf16.mxu0 0
      %1143 = vmatpush1.bf16.msra.mxu0 0
      %1144 = vmatprep.subr.bf16.mxu0 0
      %1145 = vmatpush1.bf16.msra.mxu0 0
      %1146 = vmatprep.subr.bf16.mxu0 0
      %1147 = vmatpush1.bf16.msra.mxu0 0
      %1148 = vmatprep.subr.bf16.mxu0 0
      %1149 = vmatpush1.bf16.msra.mxu0 %v1140
      %1150 = vmatprep.subr.bf16.mxu0 0
      %1151 = vmatpush1.bf16.msra.mxu0 %v1119
      %1152 = vmatprep.subr.bf16.mxu0 0
      %1153 = vmatpush1.bf16.msra.mxu0 %v1118
      %1154 = vmatprep.subr.bf16.mxu0 0
      %1155 = vmatpush1.bf16.msra.mxu0 %v1117
      %1156 = vmatprep.subr.bf16.mxu0 0
      %1157 = vmatpush1.bf16.msra.mxu0 %v1116
      %1158 = vmatprep.subr.bf16.mxu0 0
      %1159 = vmatpush2.bf16.msra.mxu0 0
      %1160 = vmatprep.subr.bf16.mxu0 0
      %1161 = vmatpush2.bf16.msra.mxu0 0
      %1162 = vmatprep.subr.bf16.mxu0 0
      %1163 = vmatpush2.bf16.msra.mxu0 0
      %1164 = vmatprep.subr.bf16.mxu0 0
      %1165 = vmatpush2.bf16.msra.mxu0 0
      %1166 = vmatprep.subr.bf16.mxu0 0
      %1167 = vmatpush2.bf16.msra.mxu0 0
      %1168 = vmatprep.subr.bf16.mxu0 0
      %1169 = vmatpush2.bf16.msra.mxu0 0
      %1170 = vmatprep.subr.bf16.mxu0 0
      %1171 = vmatpush2.bf16.msra.mxu0 0
      %1172 = vmatprep.subr.bf16.mxu0 0
      %1173 = vmatpush2.bf16.msra.mxu0 0
      %1174 = vmatprep.mubr.bf16.mxu0 0
      %1175 = vmatmul.mubr.bf16.gmra.mxu0 %v1127
      %v1176 = vpop.f32.mrf.mxu0
      %v1177 = vadd.f32 0.0, %v1176
      %v1178 = vpop.f32.mrf.mxu0
      %v1179 = vpop.f32.mrf.mxu0
      %v1180 = vadd.f32 0.0, %v1179
      %v1181 = vpop.f32.mrf.mxu0
      %1182 = vmatprep.mubr.bf16.mxu0 0
      %1183 = vmatmul.mubr.bf16.gmra.mxu0 %v1130
      %v1184 = vpop.f32.mrf.mxu0
      %v1185 = vadd.f32 0.0, %v1184
      %v1186 = vpop.f32.mrf.mxu0
      %v1187 = vpop.f32.mrf.mxu0
      %v1188 = vadd.f32 0.0, %v1187
      %v1189 = vpop.f32.mrf.mxu0
      %1190 = vmatprep.mubr.bf16.mxu0 0
      %1191 = vmatmul.mubr.bf16.gmra.mxu0 %v1133
      %v1192 = vpop.f32.mrf.mxu0
      %v1193 = vadd.f32 0.0, %v1192
      %v1194 = vpop.f32.mrf.mxu0
      %v1195 = vpop.f32.mrf.mxu0
      %v1196 = vadd.f32 0.0, %v1195
      %v1197 = vpop.f32.mrf.mxu0
      %1198 = vmatprep.mubr.bf16.mxu0 0
      %1199 = vmatmul.mubr.bf16.gmra.mxu0 %v1136
      %v1200 = vpop.f32.mrf.mxu0
      %v1201 = vadd.f32 0.0, %v1200
      %v1202 = vpop.f32.mrf.mxu0
      %v1203 = vpop.f32.mrf.mxu0
      %v1204 = vadd.f32 0.0, %v1203
      %v1205 = vpop.f32.mrf.mxu0
      %1206 = vdwg.mxu0
      %vm1207 = vcmp.ge.f32.partialorder %v1177, 0.0
      %vm1208 = vcmp.ge.f32.partialorder %v1180, 0.0
      %vm1209 = vcmp.ge.f32.partialorder %v1185, 0.0
      %vm1210 = vcmp.ge.f32.partialorder %v1188, 0.0
      %vm1211 = vcmp.ge.f32.partialorder %v1193, 0.0
      %vm1212 = vcmp.ge.f32.partialorder %v1196, 0.0
      %vm1213 = vcmp.ge.f32.partialorder %v1201, 0.0
      %vm1214 = vcmp.ge.f32.partialorder %v1204, 0.0
      %v1215 = vmul.f32 %v1177, 0.2
      %v1216 = vmul.f32 %v1180, 0.2
      %v1217 = vmul.f32 %v1185, 0.2
      %v1218 = vmul.f32 %v1188, 0.2
      %v1219 = vmul.f32 %v1193, 0.2
      %v1220 = vmul.f32 %v1196, 0.2
      %v1221 = vmul.f32 %v1201, 0.2
      %v1222 = vmul.f32 %v1204, 0.2
      %v1223 = vsel %vm1207, %v1177, %v1215
      %v1224 = vsel %vm1208, %v1180, %v1216
      %v1225 = vsel %vm1209, %v1185, %v1217
      %v1226 = vsel %vm1210, %v1188, %v1218
      %v1227 = vsel %vm1211, %v1193, %v1219
      %v1228 = vsel %vm1212, %v1196, %v1220
      %v1229 = vsel %vm1213, %v1201, %v1221
      %v1230 = vsel %vm1214, %v1204, %v1222
      %s1231 = sld [smem:[#allocation3]]
      %v1232 = vstv %s1231
      %v1233 = vmul.f32 %v1232, %v1223
      %v1234 = vmul.f32 %v1232, %v1224
      %v1235 = vmul.f32 %v1232, %v1225
      %v1236 = vmul.f32 %v1232, %v1226
      %v1237 = vmul.f32 %v1232, %v1227
      %v1238 = vmul.f32 %v1232, %v1228
      %v1239 = vmul.f32 %v1232, %v1229
      %v1240 = vmul.f32 %v1232, %v1230
      %v1241 = vadd.f32 %v622, %v1233
      %v1242 = vadd.f32 %v625, %v1234
      %v1243 = vadd.f32 %v630, %v1235
      %v1244 = vadd.f32 %v633, %v1236
      %v1245 = vadd.f32 %v638, %v1237
      %v1246 = vadd.f32 %v641, %v1238
      %v1247 = vadd.f32 %v646, %v1239
      %v1248 = vadd.f32 %v649, %v1240
      %1249 = vst.msk [vmem:[%s252] sm:$0xff] %vm652, %v1241
      %1250 = vst.msk [vmem:[%s252 + $0x8] sm:$0xff] %vm652, %v1242
      %1251 = vst.msk [vmem:[%s252 + $0x10] sm:$0xff] %vm652, %v1243
      %1252 = vst.msk [vmem:[%s252 + $0x18] sm:$0xff] %vm652, %v1244
      %1253 = vst.msk [vmem:[%s252 + $0x20] sm:$0xff] %vm652, %v1245
      %1254 = vst.msk [vmem:[%s252 + $0x28] sm:$0xff] %vm652, %v1246
      %1255 = vst.msk [vmem:[%s252 + $0x30] sm:$0xff] %vm652, %v1247
      %1256 = vst.msk [vmem:[%s252 + $0x38] sm:$0xff] %vm652, %v1248
      %p1257 = scmp.lt.s32.totalorder %s18, 1
      %s1258 = scalar_select %p1257, %s18, 1
      %s1259 = smul.addr %s1258, 8
      %s1260 = smul.addr %s1259, 8
      %s1261 = scalar_lea.vmem %s6, %s1260
      // Predicated region
      $region45: #{residual_block_d.1} parent=43 // pred_check
        %p1262 = pneg %p167
      $region46: #{residual_block_d.1} parent=43 // pred_check_branch
        %1264 = sbr.rel (%p1262) target = $region48
      $region47: #{residual_block_d.1} parent=43 // pred_region
        _
      $region48: #{residual_block_d.1} parent=43 // pred_fallthru
        _
    $region44: #{residual_block_d.1} parent=5 // pred_fallthru
      _
    %p1265 = scmp.le.s32.totalorder 2, %s13
    // Predicated region
    $region49: #{residual_block_d.1} parent=5 // pred_check
      %p1266 = pneg %p1265
    $region50: #{residual_block_d.1} parent=5 // pred_check_branch
      %1268 = sbr.rel (%p1266) target = $region52
    $region51: #{residual_block_d.1} parent=5 // pred_region
      %s1269 = ssub.s32 %s13, 2
      // Predicated region
      $region53: #{residual_block_d.1} parent=51 // pred_check
        %p1270 = pneg %p173
      $region54: #{residual_block_d.1} parent=51 // pred_check_branch
        %1272 = sbr.rel (%p1270) target = $region56
      $region55: #{residual_block_d.1} parent=51 // pred_region
        %p1273 = scmp.lt.s32.totalorder %s19, 1
        %s1274 = scalar_select %p1273, %s19, 1
        %s1275 = smul.addr %s1274, 8
        %s1276 = smul.addr %s1275, 8
        %s1277 = scalar_lea.vmem %s6, %s1276
      $region56: #{residual_block_d.1} parent=51 // pred_fallthru
        _
    $region52: #{residual_block_d.1} parent=5 // pred_fallthru
      _
  $region6: #{residual_block_d.1} parent=0 // loop_footer
    %s17 = sadd.s32 1, %s13
  $region7: #{residual_block_d.1} parent=0 // loop_footer_branch
    %12 = sbr.rel target = $region3
  $region8: #{residual_block_d.1} parent=0 // loop_exit
    _

</llo_original>
